<compile_context>
chip_gen: v6e
topology: v6e:2x2x1
jax: 0.10.0
libtpu: 0.0.40
codegen_flags: <defaults>
</compile_context>

<pallas_src>
import jax
import jax.numpy as jnp
from jax.experimental import pallas as pl
from jax.experimental.pallas import tpu as pltpu


def _tanh_silu_kernel(x_ref, o_ref):
    x = x_ref[...].astype(jnp.float32)
    o_ref[...] = jnp.tanh(x * jax.nn.sigmoid(x)).astype(o_ref.dtype)


def hyperbolic_tangent_silu(x: jax.Array, *, lanes: int = 512,
                            max_tile_rows: int = 1024) -> jax.Array:
    """Elementwise tanh(SiLU(x)) for any shape / float dtype.

    `lanes` must be a multiple of 128; `max_tile_rows` a multiple of 32
    (covers the sublane packing requirement of f32 / bf16 / 8-bit dtypes).
    """
    orig_shape = x.shape
    orig_dtype = x.dtype
    n = x.size
    if n == 0:
        return x

    # Lane-dense 2D slab: (rows, lanes).
    rows = pl.cdiv(n, lanes)
    padded_n = rows * lanes

    x_flat = jnp.ravel(x)
    if padded_n != n:
        # Only when n is not a multiple of `lanes`; pads < `lanes` elements.
        x_flat = jnp.pad(x_flat, (0, padded_n - n))
    x2d = x_flat.reshape(rows, lanes)

    if rows <= max_tile_rows:
        # Single block equal to the full array: one grid step, no row padding,
        # and no (8,128) divisibility constraint (block == full dims).
        tm = rows
    else:
        # Big tiles; 1024 rows is a multiple of every dtype's sublane packing.
        # A ragged last block (rows % tm != 0) is handled by Pallas: the DMA
        # only moves the valid sub-region and out-of-bounds writes are masked,
        # which is safe for a pure elementwise op.
        tm = max_tile_rows

    grid = (pl.cdiv(rows, tm),)
    itemsize = jnp.dtype(orig_dtype).itemsize

    out2d = pl.pallas_call(
        _tanh_silu_kernel,
        out_shape=jax.ShapeDtypeStruct((rows, lanes), orig_dtype),
        grid_spec=pltpu.PrefetchScalarGridSpec(
            num_scalar_prefetch=0,
            grid=grid,
            in_specs=[pl.BlockSpec((tm, lanes), lambda i: (i, 0))],
            out_specs=pl.BlockSpec((tm, lanes), lambda i: (i, 0)),
        ),
        compiler_params=pltpu.CompilerParams(
            dimension_semantics=("parallel",),
        ),
        cost_estimate=pl.CostEstimate(
            flops=3 * padded_n,
            transcendentals=2 * padded_n,          # sigmoid + tanh per element
            bytes_accessed=2 * padded_n * itemsize,
        ),
    )(x2d)

    out_flat = out2d.reshape(-1)
    if padded_n != n:
        out_flat = out_flat[:n]
    return out_flat.reshape(orig_shape)


def _reference(x):
    xf = x.astype(jnp.float32)
    return jnp.tanh(xf * jax.nn.sigmoid(xf)).astype(x.dtype)


if __name__ == "__main__":
    key = jax.random.PRNGKey(0)
    # Small NCHW-shaped input consistent with typical module usage.
    x = jax.random.normal(key, (2, 4, 16, 16), dtype=jnp.float32)

    out = jax.block_until_ready(hyperbolic_tangent_silu(x))

    ref = _reference(x)
    assert out.shape == x.shape
    assert out.dtype == x.dtype
    assert jnp.allclose(out, ref, atol=1e-5, rtol=1e-5), "mismatch vs reference"

    print("KERNEL_OK")
</pallas_src>

<mosaic_0001>
module attributes {stable_mosaic.version = 11 : i64} {
  func.func @_tanh_silu_kernel(%arg0: i32, %arg1: memref<4x512xf32, #tpu.memory_space<vmem>>, %arg2: memref<4x512xf32, #tpu.memory_space<vmem>>) attributes {dimension_semantics = [#tpu.dimension_semantics<parallel>], iteration_bounds = array<i64: 1>, scalar_prefetch = 0 : i64, scratch_operands = 0 : i64, tpu.core_type = #tpu.core_type<tc>, window_params = [{transform_indices = @transform_0, window_bounds = array<i64: 4, 512>}, {transform_indices = @transform_1, window_bounds = array<i64: 4, 512>}]} {
    %c0 = arith.constant 0 : index
    %c0_0 = arith.constant 0 : index
    %0 = vector.load %arg1[%c0, %c0_0] : memref<4x512xf32, #tpu.memory_space<vmem>>, vector<4x512xf32>
    %1 = arith.negf %0 : vector<4x512xf32>
    %2 = math.exp %1 : vector<4x512xf32>
    %cst = arith.constant 1.000000e+00 : f32
    %3 = vector.broadcast %cst : f32 to vector<4x512xf32>
    %4 = arith.addf %3, %2 : vector<4x512xf32>
    %5 = arith.divf %3, %4 : vector<4x512xf32>
    %6 = arith.mulf %0, %5 : vector<4x512xf32>
    %7 = math.tanh %6 : vector<4x512xf32>
    %c0_1 = arith.constant 0 : index
    %c0_2 = arith.constant 0 : index
    %8 = vector.load %arg2[%c0_1, %c0_2] : memref<4x512xf32, #tpu.memory_space<vmem>>, vector<4x512xf32>
    tpu.vector_store %arg2[%c0_1, %c0_2], %7 {strides = array<i32>} : memref<4x512xf32, #tpu.memory_space<vmem>>, vector<4x512xf32>,
    return
  }
  func.func @transform_0(%arg0: i32) -> (i32, i32) {
    %c0_i32 = arith.constant 0 : i32
    %c0_i32_0 = arith.constant 0 : i32
    return %arg0, %c0_i32 : i32, i32
  }
  func.func @transform_1(%arg0: i32) -> (i32, i32) {
    %c0_i32 = arith.constant 0 : i32
    %c0_i32_0 = arith.constant 0 : i32
    return %arg0, %c0_i32 : i32, i32
  }
}

</mosaic_0001>

<llo_original>
// kernel: tpu_custom_call.1
$region0: #{tpu_custom_call.1}
  #allocation0 [shape = 'u32[]', space=smem, size = 0x4, offset = 0x4, fixed_abs, tag = 'smem constant byte address 0x4 - core index']
  #allocation1 [shape = 'u32[144,128]{1,0:T(1,128)}', space=vmem, size = 0x12000, scoped, tag = 'internal scratch']
  %s0 = inlined_call_operand.hbm [shape: f32[4,512], index: 0, kind: input, shape index: {}]
  %s1 = inlined_call_operand.hbm [shape: f32[4,512], index: 1, kind: output, shape index: {}]
  %s2 = sld [smem:[#allocation0]]
  $region18: #{tpu_custom_call.1} parent=0
    _
  %s4 = ssub.s32 1, %s2
  %s5 = scalar_select 0, %s4, %s2
  $region1: #{tpu_custom_call.1} parent=0
    #allocation2 [shape = 'u8[8192]{0}', space=vmem, size = 0x2000, scoped, tag = 'input window, operand 0, single buffered']
    #allocation3 [shape = 's32[1]{0}', space=sflag, size = 0x4, scoped, tag = 'scoped memory for tpu_custom_call.1']
    #allocation4 [shape = 's32[1]{0}', space=sflag, size = 0x4, scoped, tag = 'scoped memory for tpu_custom_call.1']
    #allocation5 [shape = 'u8[8192]{0}', space=vmem, size = 0x2000, scoped, tag = 'output window, operand 0, single buffered']
    %6 = vsyncpa [#allocation3], 0
    %7 = vsyncpa [#allocation4], 0
    // Predicated region
    $region2: #{tpu_custom_call.1} parent=1 // pred_check
      _
    $region3: #{tpu_custom_call.1} parent=1 // pred_check_branch
      %9 = sbr.rel (0) target = $region5
    $region4: #{tpu_custom_call.1} parent=1 // pred_region
      %s11 = ssub.s32 256, 256
      %12 = vsyncadd [#allocation3], %s11
      %s14 = sshll.u32 [#allocation2], 4
      %s15 = int_to_ptr.vmem [resolvable:$true] %s14
      %17 = dma.hbm_to_vmem [thread:$0]  %s0, 256, %s15, [#allocation3]
    $region5: #{tpu_custom_call.1} parent=1 // pred_fallthru
      _
    // Predicated region
    $region6: #{tpu_custom_call.1} parent=1 // pred_check
      _
    $region7: #{tpu_custom_call.1} parent=1 // pred_check_branch
      %19 = sbr.rel (0) target = $region9
    $region8: #{tpu_custom_call.1} parent=1 // pred_region
      %20 = dma.done [#allocation3], 256
    $region9: #{tpu_custom_call.1} parent=1 // pred_fallthru
      _
    %v21 = vld [vmem:[#allocation2] sm:$0xff]
    %v22 = vld [vmem:[#allocation2 + $0x8] sm:$0xff]
    %v23 = vxor.u32 %v21, 2147483648
    %v24 = vxor.u32 %v22, 2147483648
    %v25 = vmul.f32 %v23, 1.442695
    %v26 = vpow.pop %v25
    %v27 = vmul.f32 %v24, 1.442695
    %v28 = vpow.pop %v27
    %v29 = vadd.f32 %v26, 1.0
    %v30 = vadd.f32 %v28, 1.0
    %v31 = vrcp.pop %v29
    %v32 = vmul.f32 1.0, %v31
    %v33 = vrcp.pop %v30
    %v34 = vmul.f32 1.0, %v33
    %v35 = vmul.f32 %v21, %v32
    %v36 = vmul.f32 %v22, %v34
    %v37 = vtanh.pop %v35
    %v38 = vtanh.pop %v36
    %39 = vst [vmem:[#allocation5] sm:$0xff] %v37
    %40 = vst [vmem:[#allocation5 + $0x8] sm:$0xff] %v38
    // Predicated region
    $region10: #{tpu_custom_call.1} parent=1 // pred_check
      _
    $region11: #{tpu_custom_call.1} parent=1 // pred_check_branch
      %42 = sbr.rel (0) target = $region13
    $region12: #{tpu_custom_call.1} parent=1 // pred_region
      %s44 = ssub.s32 256, 256
      %45 = vsyncadd [#allocation4], %s44
      %s47 = sshll.u32 [#allocation5], 4
      %s48 = int_to_ptr.vmem [resolvable:$true] %s47
      %50 = dma.vmem_to_hbm [thread:$0]  %s48, 256, %s1, [#allocation4]
    $region13: #{tpu_custom_call.1} parent=1 // pred_fallthru
      _
    // Predicated region
    $region14: #{tpu_custom_call.1} parent=1 // pred_check
      _
    $region15: #{tpu_custom_call.1} parent=1 // pred_check_branch
      %52 = sbr.rel (0) target = $region17
    $region16: #{tpu_custom_call.1} parent=1 // pred_region
      %53 = dma.done [#allocation4], 256
    $region17: #{tpu_custom_call.1} parent=1 // pred_fallthru
      _
    %54 = vsyncpa [#allocation3], 1
    %55 = vsyncpa [#allocation4], 1

</llo_original>
